<compile_context>
chip_gen: v5e
topology: v5e:2x2
jax: 0.10.0
libtpu: 0.0.40
codegen_flags: <defaults>
</compile_context>

<pallas_src>
import functools
import math

import jax
import jax.numpy as jnp
from jax.experimental import pallas as pl
from jax.experimental.pallas import tpu as pltpu

_LANE = 1024      # lane width of the 2D slab; large multiple of 128
_TILE_M = 256     # rows per block (multiple of 8 for f32, 16 for bf16)


def _lambda_kernel(x_ref, o_ref, *, func):
    # Apply the wrapped elementwise function to the whole VMEM tile.
    o_ref[...] = func(x_ref[...]).astype(o_ref.dtype)


class LambdaLayer:
    """Pallas-backed equivalent of the PyTorch LambdaLayer."""

    def __init__(self, func):
        self.func = func

    def __call__(self, x):
        orig_shape = x.shape
        total = math.prod(orig_shape) if orig_shape else 1

        # ---- choose tiling (static, derived from shapes only) ----
        rows = pl.cdiv(total, _LANE)
        if rows >= _TILE_M:
            tile_m = _TILE_M
            rows_padded = pl.cdiv(rows, _TILE_M) * _TILE_M
        else:
            # Block equals the full row extent (allowed even if < 8).
            tile_m = rows
            rows_padded = rows
        padded_total = rows_padded * _LANE

        # ---- flatten to a lane-dense 2D slab, pad if needed ----
        flat = x.reshape(-1)
        if padded_total != total:
            flat = jnp.pad(flat, (0, padded_total - total))
        x2d = flat.reshape(rows_padded, _LANE)

        # ---- determine output dtype / validate shape preservation ----
        out_aval = jax.eval_shape(
            self.func, jax.ShapeDtypeStruct((tile_m, _LANE), x.dtype)
        )
        if out_aval.shape != (tile_m, _LANE):
            raise ValueError(
                "LambdaLayer Pallas kernel only supports elementwise, "
                "shape-preserving lambdas (see TODO)."
            )
        out_dtype = out_aval.dtype

        kernel = functools.partial(_lambda_kernel, func=self.func)
        y2d = pl.pallas_call(
            kernel,
            out_shape=jax.ShapeDtypeStruct((rows_padded, _LANE), out_dtype),
            grid=(rows_padded // tile_m,),
            in_specs=[pl.BlockSpec((tile_m, _LANE), lambda i: (i, 0))],
            out_specs=pl.BlockSpec((tile_m, _LANE), lambda i: (i, 0)),
            compiler_params=pltpu.CompilerParams(
                dimension_semantics=("parallel",),
            ),
        )(x2d)

        # ---- strip padding and restore original shape ----
        y_flat = y2d.reshape(-1)
        if padded_total != total:
            y_flat = y_flat[:total]
        return y_flat.reshape(orig_shape)


if __name__ == "__main__":
    key = jax.random.PRNGKey(0)
    # Small NCHW input consistent with a conv-style network: N=2, C=4, H=W=16.
    x = jax.random.normal(key, (2, 4, 16, 16), dtype=jnp.float32)

    # Example lambda (elementwise, shape-preserving), exactly as one would pass
    # to LambdaLayer(func) in PyTorch.
    func = lambda t: jax.nn.gelu(t) * 2.0 + 1.0

    layer = LambdaLayer(func)
    y = layer(x)
    y = jax.block_until_ready(y)

    # Correctness check vs. plain JAX application of the same lambda.
    y_ref = func(x)
    assert y.shape == x.shape and y.dtype == y_ref.dtype
    assert jnp.allclose(y, y_ref, atol=1e-5, rtol=1e-5)

    # Also exercise a shape whose trailing dims are NOT 128-friendly and whose
    # flat size needs padding (H=W=7 -> 7*7=49), to validate the tiled path.
    x2 = jax.random.normal(jax.random.PRNGKey(1), (3, 5, 7, 7), dtype=jnp.float32)
    y2 = jax.block_until_ready(layer(x2))
    assert y2.shape == x2.shape
    assert jnp.allclose(y2, func(x2), atol=1e-5, rtol=1e-5)

    print("KERNEL_OK")
</pallas_src>

<mosaic_0001>
module attributes {stable_mosaic.version = 11 : i64} {
  func.func @_lambda_kernel(%arg0: i32, %arg1: memref<2x1024xf32, #tpu.memory_space<vmem>>, %arg2: memref<2x1024xf32, #tpu.memory_space<vmem>>) attributes {dimension_semantics = [#tpu.dimension_semantics<parallel>], iteration_bounds = array<i64: 1>, scalar_prefetch = 0 : i64, scratch_operands = 0 : i64, tpu.core_type = #tpu.core_type<tc>, window_params = [{transform_indices = @transform_0, window_bounds = array<i64: 2, 1024>}, {transform_indices = @transform_1, window_bounds = array<i64: 2, 1024>}]} {
    %c0 = arith.constant 0 : index
    %c0_0 = arith.constant 0 : index
    %0 = vector.load %arg1[%c0, %c0_0] : memref<2x1024xf32, #tpu.memory_space<vmem>>, vector<2x1024xf32>
    %1 = arith.mulf %0, %0 : vector<2x1024xf32>
    %2 = arith.mulf %0, %1 : vector<2x1024xf32>
    %cst = arith.constant 4.471500e-02 : f32
    %3 = vector.broadcast %cst : f32 to vector<2x1024xf32>
    %4 = arith.mulf %3, %2 : vector<2x1024xf32>
    %5 = arith.addf %0, %4 : vector<2x1024xf32>
    %cst_1 = arith.constant 0.797884583 : f32
    %6 = vector.broadcast %cst_1 : f32 to vector<2x1024xf32>
    %7 = arith.mulf %6, %5 : vector<2x1024xf32>
    %8 = math.tanh %7 : vector<2x1024xf32>
    %cst_2 = arith.constant 1.000000e+00 : f32
    %9 = vector.broadcast %cst_2 : f32 to vector<2x1024xf32>
    %10 = arith.addf %9, %8 : vector<2x1024xf32>
    %cst_3 = arith.constant 5.000000e-01 : f32
    %11 = vector.broadcast %cst_3 : f32 to vector<2x1024xf32>
    %12 = arith.mulf %11, %10 : vector<2x1024xf32>
    %13 = arith.mulf %0, %12 : vector<2x1024xf32>
    %cst_4 = arith.constant 2.000000e+00 : f32
    %14 = vector.broadcast %cst_4 : f32 to vector<2x1024xf32>
    %15 = arith.mulf %13, %14 : vector<2x1024xf32>
    %cst_5 = arith.constant 1.000000e+00 : f32
    %16 = vector.broadcast %cst_5 : f32 to vector<2x1024xf32>
    %17 = arith.addf %15, %16 : vector<2x1024xf32>
    %c0_6 = arith.constant 0 : index
    %c0_7 = arith.constant 0 : index
    %18 = vector.load %arg2[%c0_6, %c0_7] : memref<2x1024xf32, #tpu.memory_space<vmem>>, vector<2x1024xf32>
    tpu.vector_store %arg2[%c0_6, %c0_7], %17 {strides = array<i32>} : memref<2x1024xf32, #tpu.memory_space<vmem>>, vector<2x1024xf32>,
    return
  }
  func.func @transform_0(%arg0: i32) -> (i32, i32) {
    %c0_i32 = arith.constant 0 : i32
    %c0_i32_0 = arith.constant 0 : i32
    return %arg0, %c0_i32 : i32, i32
  }
  func.func @transform_1(%arg0: i32) -> (i32, i32) {
    %c0_i32 = arith.constant 0 : i32
    %c0_i32_0 = arith.constant 0 : i32
    return %arg0, %c0_i32 : i32, i32
  }
}

</mosaic_0001>

<llo_original>
// kernel: tpu_custom_call.1
$region0: #{tpu_custom_call.1}
  #allocation0 [shape = 'u32[]', space=smem, size = 0x4, offset = 0x4, fixed_abs, tag = 'smem constant byte address 0x4 - core index']
  #allocation1 [shape = 'u32[72,128]{1,0:T(1,128)}', space=vmem, size = 0x9000, scoped, tag = 'internal scratch']
  %s0 = inlined_call_operand.hbm [shape: f32[2,1024], index: 0, kind: input, shape index: {}]
  %s1 = inlined_call_operand.hbm [shape: f32[2,1024], index: 1, kind: output, shape index: {}]
  %s2 = sld [smem:[#allocation0]]
  $region18: #{tpu_custom_call.1} parent=0
    _
  %s4 = ssub.s32 1, %s2
  %s5 = scalar_select 0, %s4, %s2
  $region1: #{tpu_custom_call.1} parent=0
    #allocation2 [shape = 'u8[8192]{0}', space=vmem, size = 0x2000, scoped, tag = 'input window, operand 0, single buffered']
    #allocation3 [shape = 's32[1]{0}', space=sflag, size = 0x4, scoped, tag = 'scoped memory for tpu_custom_call.1']
    #allocation4 [shape = 's32[1]{0}', space=sflag, size = 0x4, scoped, tag = 'scoped memory for tpu_custom_call.1']
    #allocation5 [shape = 'u8[8192]{0}', space=vmem, size = 0x2000, scoped, tag = 'output window, operand 0, single buffered']
    %6 = vsyncpa [#allocation3], 0
    %7 = vsyncpa [#allocation4], 0
    // Predicated region
    $region2: #{tpu_custom_call.1} parent=1 // pred_check
      _
    $region3: #{tpu_custom_call.1} parent=1 // pred_check_branch
      %9 = sbr.rel (0) target = $region5
    $region4: #{tpu_custom_call.1} parent=1 // pred_region
      %11 = vsyncadd [#allocation3], 0
      %s13 = sshll.u32 %s0, 4
      %s14 = int_to_ptr.hbm [resolvable:$true] %s13
      %s15 = sshll.u32 [#allocation2], 4
      %s16 = int_to_ptr.vmem [resolvable:$true] %s15
      %18 = dma.hbm_to_vmem [thread:$0]  %s14, 256, %s16, [#allocation3]
    $region5: #{tpu_custom_call.1} parent=1 // pred_fallthru
      _
    // Predicated region
    $region6: #{tpu_custom_call.1} parent=1 // pred_check
      _
    $region7: #{tpu_custom_call.1} parent=1 // pred_check_branch
      %20 = sbr.rel (0) target = $region9
    $region8: #{tpu_custom_call.1} parent=1 // pred_region
      %22 = dma.done [#allocation3], 256
    $region9: #{tpu_custom_call.1} parent=1 // pred_fallthru
      _
    %v23 = vld [vmem:[#allocation2] sm:$0xff]
    %v24 = vld [vmem:[#allocation2 + $0x8] sm:$0xff]
    %v25 = vmul.f32 %v23, %v23
    %v26 = vmul.f32 %v24, %v24
    %v27 = vmul.f32 %v23, %v25
    %v28 = vmul.f32 %v24, %v26
    %v29 = vmul.f32 %v27, 0.044715
    %v30 = vmul.f32 %v28, 0.044715
    %v31 = vadd.f32 %v23, %v29
    %v32 = vadd.f32 %v24, %v30
    %v33 = vmul.f32 %v31, 0.7978846
    %v34 = vmul.f32 %v32, 0.7978846
    %v35 = vtanh.pop %v33
    %v36 = vtanh.pop %v34
    %v37 = vadd.f32 %v35, 1.0
    %v38 = vadd.f32 %v36, 1.0
    %v39 = vmul.f32 %v37, 0.5
    %v40 = vmul.f32 %v38, 0.5
    %v41 = vmul.f32 %v23, %v39
    %v42 = vmul.f32 %v24, %v40
    %v43 = vmul.f32 %v41, 2.0
    %v44 = vmul.f32 %v42, 2.0
    %v45 = vadd.f32 %v43, 1.0
    %v46 = vadd.f32 %v44, 1.0
    %47 = vst [vmem:[#allocation5] sm:$0xff] %v45
    %48 = vst [vmem:[#allocation5 + $0x8] sm:$0xff] %v46
    // Predicated region
    $region10: #{tpu_custom_call.1} parent=1 // pred_check
      _
    $region11: #{tpu_custom_call.1} parent=1 // pred_check_branch
      %50 = sbr.rel (0) target = $region13
    $region12: #{tpu_custom_call.1} parent=1 // pred_region
      %52 = vsyncadd [#allocation4], 0
      %s54 = sshll.u32 [#allocation5], 4
      %s55 = int_to_ptr.vmem [resolvable:$true] %s54
      %s56 = sshll.u32 %s1, 4
      %s57 = int_to_ptr.hbm [resolvable:$true] %s56
      %59 = dma.vmem_to_hbm [thread:$0]  %s55, 256, %s57, [#allocation4]
    $region13: #{tpu_custom_call.1} parent=1 // pred_fallthru
      _
    // Predicated region
    $region14: #{tpu_custom_call.1} parent=1 // pred_check
      _
    $region15: #{tpu_custom_call.1} parent=1 // pred_check_branch
      %61 = sbr.rel (0) target = $region17
    $region16: #{tpu_custom_call.1} parent=1 // pred_region
      %63 = dma.done [#allocation4], 256
    $region17: #{tpu_custom_call.1} parent=1 // pred_fallthru
      _
    %64 = vsyncpa [#allocation3], 1
    %65 = vsyncpa [#allocation4], 1

</llo_original>
